<compile_context>
chip_gen: v7x
topology: tpu7x:2x2x1
jax: 0.10.0
libtpu: 0.0.40
codegen_flags: <defaults>
</compile_context>

<pallas_src>
import functools

import jax
import jax.numpy as jnp
from jax.experimental import pallas as pl
from jax.experimental.pallas import tpu as pltpu

_PAIRWISE_EPS = 1e-6  # torch F.pairwise_distance default eps


def _contrastive_loss_kernel(o1_ref, o2_ref, out_ref, acc_ref, *,
                             margin, n_rows, needs_mask):
    i = pl.program_id(0)
    tn = o1_ref.shape[0]

    @pl.when(i == 0)
    def _init():
        acc_ref[0, 0] = jnp.float32(0.0)

    # Tiles were DMA'd in native dtype; upcast in vregs (free vs HBM bandwidth).
    o1 = o1_ref[...].astype(jnp.float32)
    o2 = o2_ref[...].astype(jnp.float32)

    diff = o1 - o2 + _PAIRWISE_EPS                        # (TN, D)
    d2 = jnp.sum(diff * diff, axis=-1, keepdims=True)     # (TN, 1) squared distance
    d = jnp.sqrt(d2)                                      # (TN, 1) euclidean distance
    hinge = jnp.maximum(margin - d, 0.0)                  # clamp(margin - d, min=0)
    per_row = d2 + hinge * hinge                          # (TN, 1)

    if needs_mask:
        # Mask rows past the true batch size (ragged last tile) before summing.
        row_ids = i * tn + jax.lax.broadcasted_iota(jnp.int32, per_row.shape, 0)
        per_row = jnp.where(row_ids < n_rows, per_row, 0.0)

    acc_ref[0, 0] += jnp.sum(per_row)

    @pl.when(i == pl.num_programs(0) - 1)
    def _finalize():
        out_ref[0, 0] = acc_ref[0, 0] / jnp.float32(n_rows)


def _round_up(x, m):
    return ((x + m - 1) // m) * m


def _choose_tile_rows(n, d, itemsize):
    # Sublane packing: 8 rows for 32-bit dtypes, 16 for 16-bit, 32 for 8-bit.
    sub = {4: 8, 2: 16, 1: 32}.get(itemsize, 8)
    # Keep 2 inputs x 2 double-buffers x (tn x d x itemsize) under ~8 MiB so the
    # pipeline buffers fit the scoped VMEM default on all generations
    # (v5e 16 MiB, v6e/v7x 32 MiB scoped) with headroom for compiler scratch.
    budget_bytes = 8 * 1024 * 1024
    max_rows = max(sub, ((budget_bytes // (4 * d * itemsize)) // sub) * sub)
    tn = min(max_rows, _round_up(n, sub))
    return max(sub, (tn // sub) * sub)


def contrastive_loss(output1, output2, margin=2.0, tile_rows=None):
    """Pallas TPU implementation of ContrastiveLoss.forward."""
    assert output1.shape == output2.shape and output1.ndim == 2
    assert output1.dtype == output2.dtype
    n, d = output1.shape
    itemsize = jnp.dtype(output1.dtype).itemsize
    tn = tile_rows if tile_rows is not None else _choose_tile_rows(n, d, itemsize)
    grid = (pl.cdiv(n, tn),)
    needs_mask = (n % tn) != 0

    kernel = functools.partial(
        _contrastive_loss_kernel,
        margin=float(margin), n_rows=n, needs_mask=needs_mask)

    # Advisory cost hint: this kernel is bytes-bound (2 * N * D input reads).
    cost = pl.CostEstimate(
        flops=3 * n * d + 8 * n,
        transcendentals=n,                      # one sqrt per row
        bytes_accessed=2 * n * d * itemsize + 4,
    )

    out = pl.pallas_call(
        kernel,
        out_shape=jax.ShapeDtypeStruct((1, 1), jnp.float32),
        grid_spec=pltpu.PrefetchScalarGridSpec(
            num_scalar_prefetch=0,
            grid=grid,
            in_specs=[
                pl.BlockSpec((tn, d), lambda i: (i, 0)),
                pl.BlockSpec((tn, d), lambda i: (i, 0)),
            ],
            out_specs=pl.BlockSpec(memory_space=pltpu.SMEM),
            scratch_shapes=[pltpu.SMEM((1, 1), jnp.float32)],
        ),
        compiler_params=pltpu.CompilerParams(
            dimension_semantics=("arbitrary",),   # carried accumulator over batch tiles
        ),
        cost_estimate=cost,
    )(output1, output2)
    return out[0, 0]


def _reference(output1, output2, margin=2.0):
    # Pure-JAX reference mirroring the torch semantics.
    diff = output1.astype(jnp.float32) - output2.astype(jnp.float32) + _PAIRWISE_EPS
    d = jnp.sqrt(jnp.sum(diff * diff, axis=-1))
    return jnp.mean(d * d + jnp.clip(margin - d, 0.0, None) ** 2)


if __name__ == "__main__":
    # ContrastiveLoss has no learnable parameters; margin=2.0 as in __init__.
    key = jax.random.PRNGKey(0)
    k1, k2, k3, k4 = jax.random.split(key, 4)

    # Case 1: small (batch, hidden) consistent with pairwise_distance inputs.
    N, D = 8, 32
    output1 = jax.random.normal(k1, (N, D), dtype=jnp.float32)
    output2 = jax.random.normal(k2, (N, D), dtype=jnp.float32)
    loss = jax.block_until_ready(contrastive_loss(output1, output2, margin=2.0))
    ref = _reference(output1, output2, margin=2.0)
    assert jnp.allclose(loss, ref, rtol=1e-5, atol=1e-5), (loss, ref)

    # Case 2: multi-tile grid with a ragged (masked) last tile, forced small tile.
    N2 = 20
    a = jax.random.normal(k3, (N2, D), dtype=jnp.float32)
    b = jax.random.normal(k4, (N2, D), dtype=jnp.float32)
    loss2 = jax.block_until_ready(contrastive_loss(a, b, margin=2.0, tile_rows=8))
    ref2 = _reference(a, b, margin=2.0)
    assert jnp.allclose(loss2, ref2, rtol=1e-5, atol=1e-5), (loss2, ref2)

    # Case 3: bf16 inputs DMA'd in native dtype, f32 accumulation in-kernel.
    a16 = a.astype(jnp.bfloat16)
    b16 = b.astype(jnp.bfloat16)
    loss3 = jax.block_until_ready(contrastive_loss(a16, b16, margin=2.0))
    ref3 = _reference(a16, b16, margin=2.0)
    assert jnp.allclose(loss3, ref3, rtol=1e-3, atol=1e-3), (loss3, ref3)

    print("KERNEL_OK")
</pallas_src>

<mosaic_0001>
module attributes {stable_mosaic.version = 11 : i64} {
  func.func @_contrastive_loss_kernel(%arg0: i32, %arg1: memref<8x32xf32, #tpu.memory_space<vmem>>, %arg2: memref<8x32xf32, #tpu.memory_space<vmem>>, %arg3: memref<1x1xf32, #tpu.memory_space<smem>>, %arg4: memref<1x1xf32, #tpu.memory_space<smem>>) attributes {dimension_semantics = [#tpu.dimension_semantics<arbitrary>], iteration_bounds = array<i64: 1>, scalar_prefetch = 0 : i64, scratch_operands = 1 : i64, tpu.core_type = #tpu.core_type<tc>, window_params = [{transform_indices = @transform_0, window_bounds = array<i64: 8, 32>}, {transform_indices = @transform_1, window_bounds = array<i64: 8, 32>}, {transform_indices = @transform_2, window_bounds = array<i64: 1, 1>}]} {
    %c0_i32 = arith.constant 0 : i32
    %0 = arith.cmpi eq, %arg0, %c0_i32 : i32
    %1 = arith.extui %0 : i1 to i32
    %c0_i32_0 = arith.constant 0 : i32
    %2 = arith.cmpi ne, %1, %c0_i32_0 : i32
    scf.if %2 {
      %cst_14 = arith.constant 0.000000e+00 : f32
      %c0_15 = arith.constant 0 : index
      %c0_16 = arith.constant 0 : index
      %28 = memref.load %arg4[%c0_15, %c0_16] : memref<1x1xf32, #tpu.memory_space<smem>>
      memref.store %cst_14, %arg4[%c0_15, %c0_16] : memref<1x1xf32, #tpu.memory_space<smem>>
    } else {
    }
    %c0 = arith.constant 0 : index
    %c0_1 = arith.constant 0 : index
    %3 = vector.load %arg1[%c0, %c0_1] : memref<8x32xf32, #tpu.memory_space<vmem>>, vector<8x32xf32>
    %c0_2 = arith.constant 0 : index
    %c0_3 = arith.constant 0 : index
    %4 = vector.load %arg2[%c0_2, %c0_3] : memref<8x32xf32, #tpu.memory_space<vmem>>, vector<8x32xf32>
    %5 = arith.subf %3, %4 : vector<8x32xf32>
    %cst = arith.constant 9.99999997E-7 : f32
    %6 = vector.broadcast %cst : f32 to vector<8x32xf32>
    %7 = arith.addf %5, %6 : vector<8x32xf32>
    %8 = arith.mulf %7, %7 : vector<8x32xf32>
    %cst_4 = arith.constant dense<0.000000e+00> : vector<8xf32>
    %9 = vector.multi_reduction <add>, %8, %cst_4 [1] : vector<8x32xf32> to vector<8xf32>
    %10 = vector.shape_cast %9 : vector<8xf32> to vector<8x1xf32>
    %11 = math.sqrt %10 : vector<8x1xf32>
    %cst_5 = arith.constant 2.000000e+00 : f32
    %12 = vector.broadcast %cst_5 : f32 to vector<8x1xf32>
    %13 = arith.subf %12, %11 : vector<8x1xf32>
    %cst_6 = arith.constant 0.000000e+00 : f32
    %14 = vector.broadcast %cst_6 : f32 to vector<8x1xf32>
    %15 = arith.maximumf %13, %14 : vector<8x1xf32>
    %16 = arith.mulf %15, %15 : vector<8x1xf32>
    %17 = arith.addf %10, %16 : vector<8x1xf32>
    %c0_7 = arith.constant 0 : index
    %c0_8 = arith.constant 0 : index
    %18 = memref.load %arg4[%c0_7, %c0_8] : memref<1x1xf32, #tpu.memory_space<smem>>
    %19 = vector.shape_cast %17 : vector<8x1xf32> to vector<1x8x1xf32>
    %cst_9 = arith.constant dense<0.000000e+00> : vector<1xf32>
    %20 = vector.multi_reduction <add>, %19, %cst_9 [1, 2] : vector<1x8x1xf32> to vector<1xf32>
    %21 = vector.shape_cast %20 : vector<1xf32> to vector<1x1x1xf32>
    %22 = vector.extract %21[0, 0, 0] : f32 from vector<1x1x1xf32>
    %23 = arith.addf %18, %22 : f32
    %c0_10 = arith.constant 0 : index
    %c0_11 = arith.constant 0 : index
    %24 = memref.load %arg4[%c0_10, %c0_11] : memref<1x1xf32, #tpu.memory_space<smem>>
    memref.store %23, %arg4[%c0_10, %c0_11] : memref<1x1xf32, #tpu.memory_space<smem>>
    %c0_i32_12 = arith.constant 0 : i32
    %25 = arith.cmpi eq, %arg0, %c0_i32_12 : i32
    %26 = arith.extui %25 : i1 to i32
    %c0_i32_13 = arith.constant 0 : i32
    %27 = arith.cmpi ne, %26, %c0_i32_13 : i32
    scf.if %27 {
      %c0_14 = arith.constant 0 : index
      %c0_15 = arith.constant 0 : index
      %28 = memref.load %arg4[%c0_14, %c0_15] : memref<1x1xf32, #tpu.memory_space<smem>>
      %cst_16 = arith.constant 8.000000e+00 : f32
      %29 = arith.divf %28, %cst_16 : f32
      %c0_17 = arith.constant 0 : index
      %c0_18 = arith.constant 0 : index
      %30 = memref.load %arg3[%c0_17, %c0_18] : memref<1x1xf32, #tpu.memory_space<smem>>
      memref.store %29, %arg3[%c0_17, %c0_18] : memref<1x1xf32, #tpu.memory_space<smem>>
    } else {
    }
    return
  }
  func.func @transform_0(%arg0: i32) -> (i32, i32) {
    %c0_i32 = arith.constant 0 : i32
    %c0_i32_0 = arith.constant 0 : i32
    return %arg0, %c0_i32 : i32, i32
  }
  func.func @transform_1(%arg0: i32) -> (i32, i32) {
    %c0_i32 = arith.constant 0 : i32
    %c0_i32_0 = arith.constant 0 : i32
    return %arg0, %c0_i32 : i32, i32
  }
  func.func @transform_2(%arg0: i32) -> (i32, i32) {
    %c0_i32 = arith.constant 0 : i32
    %c0_i32_0 = arith.constant 0 : i32
    %c0_i32_1 = arith.constant 0 : i32
    return %c0_i32, %c0_i32_0 : i32, i32
  }
}

</mosaic_0001>

<llo_original>
// kernel: tpu_custom_call.1
$region0: #{tpu_custom_call.1}
  #allocation0 [shape = 'u32[]', space=smem, size = 0x4, offset = 0x4, fixed_abs, tag = 'smem constant byte address 0x4 - core index']
  #allocation1 [shape = 'u32[144,128]{1,0:T(1,128)}', space=vmem, size = 0x12000, scoped, tag = 'internal scratch']
  #allocation2 [shape = 'f32[1,1]{1,0:T(1,128)}', space=smem, size = 0x200, scoped, tag = 'scratch operand']
  %s0 = inlined_call_operand.hbm [shape: f32[8,32], index: 0, kind: input, shape index: {}]
  %s1 = inlined_call_operand.hbm [shape: f32[8,32], index: 1, kind: input, shape index: {}]
  %s2 = inlined_call_operand.hbm [shape: f32[1,1], index: 2, kind: output, shape index: {}]
  %s3 = sld [smem:[#allocation0]]
  $region34: #{tpu_custom_call.1} parent=0
    _
  %s5 = ssub.s32 1, %s3
  %s6 = scalar_select 0, %s5, %s3
  $region1: #{tpu_custom_call.1} parent=0
    #allocation3 [shape = 'u8[4096]{0}', space=vmem, size = 0x1000, scoped, tag = 'input window, operand 0, single buffered']
    #allocation4 [shape = 's32[1]{0}', space=sflag, size = 0x4, scoped, tag = 'scoped memory for tpu_custom_call.1']
    #allocation5 [shape = 's32[1]{0}', space=sflag, size = 0x4, scoped, tag = 'scoped memory for tpu_custom_call.1']
    #allocation6 [shape = 'u8[4096]{0}', space=vmem, size = 0x1000, scoped, tag = 'input window, operand 1, single buffered']
    #allocation7 [shape = 's32[1]{0}', space=sflag, size = 0x4, scoped, tag = 'scoped memory for tpu_custom_call.1']
    #allocation8 [shape = 'u8[512]{0}', space=smem, size = 0x200, scoped, tag = 'output window, operand 0, single buffered']
    %7 = vsyncpa [#allocation4], 0
    %8 = vsyncpa [#allocation7], 0
    %9 = vsyncpa [#allocation5], 0
    // Predicated region
    $region2: #{tpu_custom_call.1} parent=1 // pred_check
      _
    $region3: #{tpu_custom_call.1} parent=1 // pred_check_branch
      %11 = sbr.rel (0) target = $region5
    $region4: #{tpu_custom_call.1} parent=1 // pred_region
      %s13 = ssub.s32 128, 128
      %14 = vsyncadd [#allocation4], %s13
      %s16 = sshll.u32 [#allocation3], 4
      %s17 = int_to_ptr.vmem [resolvable:$true] %s16
      %19 = dma.hbm_to_vmem [thread:$0]  %s0, 128, %s17, [#allocation4]
    $region5: #{tpu_custom_call.1} parent=1 // pred_fallthru
      _
    // Predicated region
    $region6: #{tpu_custom_call.1} parent=1 // pred_check
      _
    $region7: #{tpu_custom_call.1} parent=1 // pred_check_branch
      %21 = sbr.rel (0) target = $region9
    $region8: #{tpu_custom_call.1} parent=1 // pred_region
      %s23 = ssub.s32 128, 128
      %24 = vsyncadd [#allocation7], %s23
      %s26 = sshll.u32 [#allocation6], 4
      %s27 = int_to_ptr.vmem [resolvable:$true] %s26
      %29 = dma.hbm_to_vmem [thread:$0]  %s1, 128, %s27, [#allocation7]
    $region9: #{tpu_custom_call.1} parent=1 // pred_fallthru
      _
    // Predicated region
    $region10: #{tpu_custom_call.1} parent=1 // pred_check
      _
    $region11: #{tpu_custom_call.1} parent=1 // pred_check_branch
      %31 = sbr.rel (0) target = $region13
    $region12: #{tpu_custom_call.1} parent=1 // pred_region
      %32 = dma.done [#allocation4], 128
    $region13: #{tpu_custom_call.1} parent=1 // pred_fallthru
      _
    // Predicated region
    $region14: #{tpu_custom_call.1} parent=1 // pred_check
      _
    $region15: #{tpu_custom_call.1} parent=1 // pred_check_branch
      %34 = sbr.rel (0) target = $region17
    $region16: #{tpu_custom_call.1} parent=1 // pred_region
      %35 = dma.done [#allocation7], 128
    $region17: #{tpu_custom_call.1} parent=1 // pred_fallthru
      _
    %p36 = scmp.eq.s32.totalorder 0, 0
    // Predicated region
    $region18: #{tpu_custom_call.1} parent=1 // pred_check
      %p37 = pneg %p36
    $region19: #{tpu_custom_call.1} parent=1 // pred_check_branch
      %39 = sbr.rel (%p37) target = $region21
    $region20: #{tpu_custom_call.1} parent=1 // pred_region
      %s40 = scalar_lea.smem [#allocation2], 0
      %41 = sst [smem:[%s40]] 0.0
    $region21: #{tpu_custom_call.1} parent=1 // pred_fallthru
      _
    %v42 = vld [vmem:[#allocation3] sm:$0xff]
    %v43 = vld [vmem:[#allocation6] sm:$0xff]
    %v44 = vsub.f32 %v42, %v43
    %v45 = vadd.f32 %v44, 1e-06
    %v46 = vmul.f32 %v45, %v45
    %vm47 = vcmask 261120
    %v48 = vsel %vm47, %v46, 0.0
    %49 = vadd.xlane.f32.xlu0 %v48
    %v50 = vpop.xlane.xlu0 %49
    %v51 = vrsqrt.pop %v50
    %v52 = vmul.f32 %v50, %v51
    %vm53 = vcmp.eq.f32.partialorder %v50, inf
    %v54 = vsel %vm53, %v50, %v52
    %vm55 = vcmp.eq.f32.partialorder %v50, 0.0
    %v56 = vand.u32 %v50, 2147483648
    %v57 = vsel %vm55, %v56, %v54
    %v58 = vsub.f32 2.0, %v57
    %v59 = vmax.f32 %v58, 0.0
    %v60 = vmul.f32 %v59, %v59
    %v61 = vadd.f32 %v50, %v60
    %s62 = sld [smem:[#allocation2]]
    %vm63 = vcmask 7168
    %v64 = vsel %vm63, %v61, 0.0
    %65 = vadd.xlane.f32.xlu0 %v64
    %v66 = vpop.xlane.xlu0 %65
    %v67 = vrot.slane %v66, 4
    %v68 = vadd.f32 %v66, %v67
    %v69 = vrot.slane %v68, 2
    %v70 = vadd.f32 %v68, %v69
    %v71 = vrot.slane %v70, 1
    %v72 = vadd.f32 %v70, %v71
    %s73 = vtos %v72
    %s74 = sadd.f32 %s62, %s73
    %s75 = scalar_lea.smem [#allocation2], 0
    %76 = sst [smem:[%s75]] %s74
    // Predicated region
    $region22: #{tpu_custom_call.1} parent=1 // pred_check
      %p77 = pneg %p36
    $region23: #{tpu_custom_call.1} parent=1 // pred_check_branch
      %79 = sbr.rel (%p77) target = $region25
    $region24: #{tpu_custom_call.1} parent=1 // pred_region
      %s80 = sld [smem:[#allocation2]]
      %v81 = vrcp.pop 8.0
      %s82 = vtos %v81
      %s83 = smul.f32 %s80, %s82
      %s84 = scalar_lea.smem [#allocation8], 0
      %85 = sst [smem:[%s84]] %s83
    $region25: #{tpu_custom_call.1} parent=1 // pred_fallthru
      _
    // Predicated region
    $region26: #{tpu_custom_call.1} parent=1 // pred_check
      _
    $region27: #{tpu_custom_call.1} parent=1 // pred_check_branch
      %87 = sbr.rel (0) target = $region29
    $region28: #{tpu_custom_call.1} parent=1 // pred_region
      %s89 = ssub.s32 16, 16
      %90 = vsyncadd [#allocation5], %s89
      %93 = dma.smem_to_hbm [#allocation8], 16, %s2, [#allocation5]
    $region29: #{tpu_custom_call.1} parent=1 // pred_fallthru
      _
    // Predicated region
    $region30: #{tpu_custom_call.1} parent=1 // pred_check
      _
    $region31: #{tpu_custom_call.1} parent=1 // pred_check_branch
      %95 = sbr.rel (0) target = $region33
    $region32: #{tpu_custom_call.1} parent=1 // pred_region
      %96 = dma.done [#allocation5], 16
    $region33: #{tpu_custom_call.1} parent=1 // pred_fallthru
      _
    %97 = sfence
    %98 = vsyncpa [#allocation4], 1
    %99 = vsyncpa [#allocation7], 1
    %100 = vsyncpa [#allocation5], 1

</llo_original>
